<compile_context>
chip_gen: v7x
topology: tpu7x:2x2x1
jax: 0.10.0
libtpu: 0.0.40
codegen_flags: <defaults>
</compile_context>

<pallas_src>
import functools

import jax
import jax.numpy as jnp
import numpy as np
from jax import lax
from jax.experimental import pallas as pl
from jax.experimental.pallas import tpu as pltpu


def _softplus_stable(u):
    # Overflow-safe softplus; mathematically identical to log(1 + exp(u)).
    return jnp.maximum(u, 0.0) + jnp.log(1.0 + jnp.exp(-jnp.abs(u)))


# ----------------------------------------------------------------------------
# Two-phase gridded kernel.  grid = (2, n_steps): axis 0 = phase, axis 1 = row
# block of the lane-dense (nb_pad, t) slab (flat index m = row*t + lane).
#   x_ref, wsum_ref, cdf_ref : (rb, t) blocks  (cdf is pre-shifted: slot m holds cdf_d[m-1])
#   out_ref                  : (1, 1) loss (written on the final step)
#   carry/sp0/inv_norm/sse   : (1, 1) VMEM scratch persisting across grid steps
# ----------------------------------------------------------------------------
def _slicer_loss_kernel(x_ref, wsum_ref, cdf_ref, out_ref,
                        carry_ref, sp0_ref, inv_norm_ref, sse_ref,
                        *, n_true, t, rb, n_steps, last_r, last_c):
    ph = pl.program_id(0)          # 0: norm pass, 1: loss pass
    g = pl.program_id(1)           # row-block index
    is_ph0 = ph == 0
    is_ph1 = ph == 1

    # --- shared, cheap per-block work -----------------------------------------
    u = x_ref[...] * wsum_ref[...]            # weighted_average == x * row-sum(weights)
    sp = _softplus_stable(u)                  # (rb, t)

    # Only the tail of the LAST block can be padding; one compare against a scalar
    # remaining-count masks it (O(block) work, no full-size (nb, t) temporaries).
    row = lax.broadcasted_iota(jnp.int32, (rb, 1), 0)
    lane = lax.broadcasted_iota(jnp.int32, (1, t), 1)
    flat_in_block = row * t + lane            # (rb, t) int32
    remaining = n_true - g * (rb * t)         # scalar; always > 0
    valid = flat_in_block < remaining
    spv = jnp.where(valid, sp, 0.0)

    # --- init (very first step) ------------------------------------------------
    @pl.when(jnp.logical_and(is_ph0, g == 0))
    def _():
        carry_ref[...] = jnp.zeros_like(carry_ref)
        sse_ref[...] = jnp.zeros_like(sse_ref)
        sp0_ref[...] = spv[0:1, 0:1]                         # sp[0]

    # --- phase 0: accumulate total softplus mass -> inv_norm -------------------
    @pl.when(is_ph0)
    def _():
        carry_ref[...] = carry_ref[...] + jnp.sum(spv, keepdims=True)

    @pl.when(jnp.logical_and(is_ph0, g == n_steps - 1))
    def _():
        sp_last = spv[last_r:last_r + 1, last_c:last_c + 1]  # sp[N-1]
        # trapz(softplus(u), dx=1) = sum(sp) - 0.5*(sp[0] + sp[N-1])
        norm = carry_ref[...] - 0.5 * (sp0_ref[...] + sp_last)
        # NOTE: like the PyTorch reference, no guard against norm ~ 0.
        inv_norm_ref[...] = pl.reciprocal(norm, approx=False)
        carry_ref[...] = jnp.zeros_like(carry_ref)           # reuse as phase-1 prefix carry

    # --- phase 1: blocked prefix sum -> cdf_u -> squared-error accumulation ----
    @pl.when(is_ph1)
    def _():
        # Intra-row inclusive cumsum via one (t, t) upper-triangular MXU matmul.
        jrow = lax.broadcasted_iota(jnp.int32, (t, 1), 0)
        icol = lax.broadcasted_iota(jnp.int32, (1, t), 1)
        tri = (jrow <= icol).astype(jnp.float32)             # tri[j, i] = 1 iff j <= i
        p_row = jnp.dot(spv, tri, preferred_element_type=jnp.float32)   # (rb, t)

        # Row totals already sit in the last lane of the inclusive cumsum.
        rowsum = p_row[:, t - 1:t]                            # (rb, 1)
        if rb > 1:
            # Exclusive row offsets: tiny (rb, rb) @ (rb, 1) strictly-lower matmul.
            brow = lax.broadcasted_iota(jnp.int32, (rb, 1), 0)
            bcol = lax.broadcasted_iota(jnp.int32, (1, rb), 1)
            lower = (bcol < brow).astype(jnp.float32)
            off = jnp.dot(lower, rowsum, preferred_element_type=jnp.float32)  # (rb, 1)
        else:
            off = jnp.zeros_like(rowsum)

        carry = carry_ref[...]                                # prefix of earlier blocks
        p = p_row + off + carry                               # inclusive global P[m]
        carry_ref[...] = carry + off[rb - 1:rb, :] + rowsum[rb - 1:rb, :]

        # cumulative_trapezoid re-indexed by m = n + 1 (cdf_ref is pre-shifted):
        #   cdf_u at slot m = (P[m] - 0.5*(sp[0] + sp[m])) / norm   (exactly 0 at m = 0)
        cdf_u = (p - 0.5 * (spv + sp0_ref[...])) * inv_norm_ref[...]
        diff = jnp.where(valid, cdf_ref[...] - cdf_u, 0.0)
        sse_ref[...] = sse_ref[...] + jnp.sum(diff * diff, keepdims=True)

    @pl.when(jnp.logical_and(is_ph1, g == n_steps - 1))
    def _():
        out_ref[...] = sse_ref[...] * (1.0 / float(n_true - 1))   # mse over N-1 entries


# ----------------------------------------------------------------------------
# Wrapper: init-time precompute + jitted forward (layout plumbing only)
# ----------------------------------------------------------------------------
def _pad_to_blocks(v, rows, t):
    v = v.astype(jnp.float32)
    total = rows * t
    if v.shape[0] != total:
        v = jnp.pad(v, (0, total - v.shape[0]))
    return v.reshape(rows, t)


def make_slicer_loss(weights, cdf_data, *, lane_block=256, rows_per_block=64):
    """Returns a jitted forward(x) -> scalar SlicerLoss.

    weights       : (N, K) kNN weights (init-time constant of the module)
    cdf_data      : (N-1,) CDF of the projected data (self.cdf)
    lane_block    : lane tile width; 256 fills the 256-wide MXU on v6e/v7x,
                    use 128 on v5e.
    rows_per_block: sublane rows per grid step (block = rows_per_block x lane_block).
    """
    n = int(weights.shape[0])
    t = int(lane_block)
    nb = int(pl.cdiv(n, t))                     # rows of the lane-dense layout
    rb = min(int(rows_per_block), nb)
    if rb < nb:
        rb = max(8, (rb // 8) * 8)              # keep the (8, 128) block rule legal
    n_steps = int(pl.cdiv(nb, rb))
    nb_pad = n_steps * rb

    # ---- __init__-time precompute (NOT hot-path work) --------------------------
    wsum = jnp.sum(weights.astype(jnp.float32), axis=1)      # sum_k weights[n, k]
    wsum_b = _pad_to_blocks(wsum, nb_pad, t)
    # Data CDF shifted by one slot so slot m holds cdf_data[m-1]; slot 0 / padding = 0.
    cdf_shift = jnp.zeros((nb_pad * t,), jnp.float32).at[1:n].set(
        cdf_data.astype(jnp.float32))
    cdf_b = cdf_shift.reshape(nb_pad, t)

    # Static position of flat index N-1 inside the last row block.
    last_r = (n - 1) // t - (n_steps - 1) * rb
    last_c = (n - 1) % t

    kernel = functools.partial(_slicer_loss_kernel, n_true=n, t=t, rb=rb,
                               n_steps=n_steps, last_r=last_r, last_c=last_c)

    call = pl.pallas_call(
        kernel,
        out_shape=jax.ShapeDtypeStruct((1, 1), jnp.float32),
        grid_spec=pltpu.PrefetchScalarGridSpec(
            num_scalar_prefetch=0,
            grid=(2, n_steps),                                   # (phase, row block)
            in_specs=[
                pl.BlockSpec((rb, t), lambda ph, g: (g, 0)),       # x
                pl.BlockSpec((rb, t), lambda ph, g: (g, 0)),       # sum_k weights
                pl.BlockSpec((rb, t), lambda ph, g: (g * ph, 0)),  # shifted data CDF (phase-1 only)
            ],
            out_specs=pl.BlockSpec((1, 1), lambda ph, g: (0, 0)),
            scratch_shapes=[pltpu.VMEM((1, 1), jnp.float32)] * 4,  # carry, sp0, inv_norm, sse
        ),
        compiler_params=pltpu.CompilerParams(
            dimension_semantics=("arbitrary", "arbitrary")),       # both axes carry state
    )

    @jax.jit
    def forward(x):
        x_b = _pad_to_blocks(x, nb_pad, t)       # lane-dense (nb_pad, t) slab
        return call(x_b, wsum_b, cdf_b)[0, 0]

    return forward


# ----------------------------------------------------------------------------
# Init-time helpers + pure-JAX reference (mirrors the PyTorch forward exactly)
# ----------------------------------------------------------------------------
def get_cdf_jnp(f, scale=1.0):
    u = _softplus_stable(scale * f) / scale
    norm = jnp.sum(0.5 * (u[..., :-1] + u[..., 1:]), axis=-1, keepdims=True)  # trapz, dx=1
    u = u / norm
    return jnp.cumsum(0.5 * (u[..., :-1] + u[..., 1:]), axis=-1)              # cumulative_trapezoid


def ref_forward(x, weights, cdf_data):
    u = x * weights.sum(axis=1)                 # weighted_average (literal semantics)
    sp = _softplus_stable(u)
    norm = jnp.sum(0.5 * (sp[:-1] + sp[1:]))
    spn = sp / norm
    cdf_u = jnp.cumsum(0.5 * (spn[:-1] + spn[1:]))
    return jnp.mean((cdf_data - cdf_u) ** 2)


if __name__ == "__main__":
    key = jax.random.PRNGKey(0)

    def build_case(k, n, k_neigh):
        k1, k2, k3 = jax.random.split(k, 3)
        x = jax.random.normal(k1, (n,), jnp.float32)
        # Deterministic stand-ins for the __init__-time precompute:
        #   self.weights : positive, row-normalized (as in proj_indices)
        w_raw = jax.random.uniform(k2, (n, k_neigh), jnp.float32, minval=0.1, maxval=1.0)
        weights = w_raw / w_raw.sum(axis=1, keepdims=True)
        # TODO(synk): sklearn NearestNeighbors kd-tree from __init__ has no Pallas
        # equivalent; weights/indices are synthesized deterministically instead
        # (indices never enter the literal forward math).
        data_proj = jax.random.normal(k3, (n,), jnp.float32)
        cdf_data = get_cdf_jnp(data_proj)        # shape (n-1,)
        return x, weights, cdf_data

    k_a, k_b = jax.random.split(key)

    # Case 1: small shapes implied by __init__ (domain = cartesian_prod(rec_loc, t)):
    #         n_rec=8 receivers x n_t=32 time samples -> N=256, K=4 neighbours.
    x1, w1, c1 = build_case(k_a, 8 * 32, 4)
    loss1 = make_slicer_loss(w1, c1, lane_block=256)(x1)
    jax.block_until_ready(loss1)
    np.testing.assert_allclose(np.asarray(loss1), np.asarray(ref_forward(x1, w1, c1)),
                               rtol=1e-4, atol=1e-6)

    # Case 2: multi-block case exercising the carried prefix sum, the rb>1 row-offset
    #         matmul, tail-padding masking and the 2-phase grid with several steps.
    x2, w2, c2 = build_case(k_b, 2500, 4)
    loss2 = make_slicer_loss(w2, c2, lane_block=128, rows_per_block=8)(x2)
    jax.block_until_ready(loss2)
    np.testing.assert_allclose(np.asarray(loss2), np.asarray(ref_forward(x2, w2, c2)),
                               rtol=1e-4, atol=1e-6)

    print("KERNEL_OK")
</pallas_src>

<mosaic_0001>
module attributes {stable_mosaic.version = 11 : i64} {
  func.func @_slicer_loss_kernel(%arg0: i32, %arg1: i32, %arg2: memref<1x256xf32, #tpu.memory_space<vmem>>, %arg3: memref<1x256xf32, #tpu.memory_space<vmem>>, %arg4: memref<1x256xf32, #tpu.memory_space<vmem>>, %arg5: memref<1x1xf32, #tpu.memory_space<vmem>>, %arg6: memref<1x1xf32, #tpu.memory_space<vmem>>, %arg7: memref<1x1xf32, #tpu.memory_space<vmem>>, %arg8: memref<1x1xf32, #tpu.memory_space<vmem>>, %arg9: memref<1x1xf32, #tpu.memory_space<vmem>>) attributes {dimension_semantics = [#tpu.dimension_semantics<arbitrary>, #tpu.dimension_semantics<arbitrary>], iteration_bounds = array<i64: 2, 1>, scalar_prefetch = 0 : i64, scratch_operands = 4 : i64, tpu.core_type = #tpu.core_type<tc>, window_params = [{transform_indices = @transform_0, window_bounds = array<i64: 1, 256>}, {transform_indices = @transform_1, window_bounds = array<i64: 1, 256>}, {transform_indices = @transform_2, window_bounds = array<i64: 1, 256>}, {pipeline_mode = #tpu.pipeline_mode<synchronous>, transform_indices = @transform_3, window_bounds = array<i64: 1, 1>}]} {
    %c0_i32 = arith.constant 0 : i32
    %0 = arith.cmpi eq, %arg0, %c0_i32 : i32
    %c1_i32 = arith.constant 1 : i32
    %1 = arith.cmpi eq, %arg0, %c1_i32 : i32
    %c0 = arith.constant 0 : index
    %c0_0 = arith.constant 0 : index
    %2 = vector.load %arg2[%c0, %c0_0] : memref<1x256xf32, #tpu.memory_space<vmem>>, vector<1x256xf32>
    %c0_1 = arith.constant 0 : index
    %c0_2 = arith.constant 0 : index
    %3 = vector.load %arg3[%c0_1, %c0_2] : memref<1x256xf32, #tpu.memory_space<vmem>>, vector<1x256xf32>
    %4 = arith.mulf %2, %3 : vector<1x256xf32>
    %cst = arith.constant 0.000000e+00 : f32
    %5 = vector.broadcast %cst : f32 to vector<1x256xf32>
    %6 = arith.maximumf %4, %5 : vector<1x256xf32>
    %7 = math.absf %4 : vector<1x256xf32>
    %cst_3 = arith.constant 0.000000e+00 : f32
    %8 = vector.broadcast %cst_3 : f32 to vector<1x256xf32>
    %9 = arith.subf %8, %7 : vector<1x256xf32>
    %10 = math.exp %9 : vector<1x256xf32>
    %cst_4 = arith.constant 1.000000e+00 : f32
    %11 = vector.broadcast %cst_4 : f32 to vector<1x256xf32>
    %12 = arith.addf %11, %10 : vector<1x256xf32>
    %13 = math.log %12 : vector<1x256xf32>
    %14 = arith.addf %6, %13 : vector<1x256xf32>
    %15 = tpu.iota {dimensions = array<i32: 0>} : vector<1x1xi32>
    %16 = tpu.iota {dimensions = array<i32: 1>} : vector<1x256xi32>
    %c256_i32 = arith.constant 256 : i32
    %17 = vector.broadcast %c256_i32 : i32 to vector<1x1xi32>
    %18 = arith.muli %15, %17 : vector<1x1xi32>
    %19 = vector.broadcast %18 : vector<1x1xi32> to vector<1x256xi32>
    %20 = arith.addi %19, %16 : vector<1x256xi32>
    %c256_i32_5 = arith.constant 256 : i32
    %21 = arith.muli %arg1, %c256_i32_5 : i32
    %c256_i32_6 = arith.constant 256 : i32
    %22 = arith.subi %c256_i32_6, %21 : i32
    %23 = vector.broadcast %22 : i32 to vector<1x256xi32>
    %24 = arith.cmpi slt, %20, %23 : vector<1x256xi32>
    %cst_7 = arith.constant 0.000000e+00 : f32
    %25 = vector.broadcast %cst_7 : f32 to vector<1x256xf32>
    %26 = arith.select %24, %14, %25 : vector<1x256xi1>, vector<1x256xf32>
    %c0_i32_8 = arith.constant 0 : i32
    %27 = arith.cmpi eq, %arg1, %c0_i32_8 : i32
    %28 = arith.andi %0, %27 : i1
    %29 = arith.extui %28 : i1 to i32
    %c0_i32_9 = arith.constant 0 : i32
    %30 = arith.cmpi ne, %29, %c0_i32_9 : i32
    scf.if %30 {
      %cst_16 = arith.constant 0.000000e+00 : f32
      %43 = vector.broadcast %cst_16 : f32 to vector<1x1xf32>
      %c0_17 = arith.constant 0 : index
      %c0_18 = arith.constant 0 : index
      %44 = vector.load %arg6[%c0_17, %c0_18] : memref<1x1xf32, #tpu.memory_space<vmem>>, vector<1x1xf32>
      tpu.vector_store %arg6[%c0_17, %c0_18], %43 {strides = array<i32>} : memref<1x1xf32, #tpu.memory_space<vmem>>, vector<1x1xf32>,
      %cst_19 = arith.constant 0.000000e+00 : f32
      %45 = vector.broadcast %cst_19 : f32 to vector<1x1xf32>
      %c0_20 = arith.constant 0 : index
      %c0_21 = arith.constant 0 : index
      %46 = vector.load %arg9[%c0_20, %c0_21] : memref<1x1xf32, #tpu.memory_space<vmem>>, vector<1x1xf32>
      tpu.vector_store %arg9[%c0_20, %c0_21], %45 {strides = array<i32>} : memref<1x1xf32, #tpu.memory_space<vmem>>, vector<1x1xf32>,
      %47 = vector.extract_strided_slice %26 {offsets = [0, 0], sizes = [1, 1], strides = [1, 1]} : vector<1x256xf32> to vector<1x1xf32>
      %c0_22 = arith.constant 0 : index
      %c0_23 = arith.constant 0 : index
      %48 = vector.load %arg7[%c0_22, %c0_23] : memref<1x1xf32, #tpu.memory_space<vmem>>, vector<1x1xf32>
      tpu.vector_store %arg7[%c0_22, %c0_23], %47 {strides = array<i32>} : memref<1x1xf32, #tpu.memory_space<vmem>>, vector<1x1xf32>,
    } else {
    }
    %31 = arith.extui %0 : i1 to i32
    %c0_i32_10 = arith.constant 0 : i32
    %32 = arith.cmpi ne, %31, %c0_i32_10 : i32
    scf.if %32 {
      %c0_16 = arith.constant 0 : index
      %c0_17 = arith.constant 0 : index
      %43 = vector.load %arg6[%c0_16, %c0_17] : memref<1x1xf32, #tpu.memory_space<vmem>>, vector<1x1xf32>
      %44 = vector.shape_cast %26 : vector<1x256xf32> to vector<1x1x256xf32>
      %cst_18 = arith.constant dense<0.000000e+00> : vector<1xf32>
      %45 = vector.multi_reduction <add>, %44, %cst_18 [1, 2] : vector<1x1x256xf32> to vector<1xf32>
      %46 = vector.shape_cast %45 : vector<1xf32> to vector<1x1x1xf32>
      %47 = vector.extract %46[0, 0, 0] : f32 from vector<1x1x1xf32>
      %48 = vector.broadcast %47 : f32 to vector<1x1xf32>
      %49 = arith.addf %43, %48 : vector<1x1xf32>
      %c0_19 = arith.constant 0 : index
      %c0_20 = arith.constant 0 : index
      %50 = vector.load %arg6[%c0_19, %c0_20] : memref<1x1xf32, #tpu.memory_space<vmem>>, vector<1x1xf32>
      tpu.vector_store %arg6[%c0_19, %c0_20], %49 {strides = array<i32>} : memref<1x1xf32, #tpu.memory_space<vmem>>, vector<1x1xf32>,
    } else {
    }
    %c0_i32_11 = arith.constant 0 : i32
    %33 = arith.cmpi eq, %arg1, %c0_i32_11 : i32
    %34 = arith.andi %0, %33 : i1
    %35 = arith.extui %34 : i1 to i32
    %c0_i32_12 = arith.constant 0 : i32
    %36 = arith.cmpi ne, %35, %c0_i32_12 : i32
    scf.if %36 {
      %43 = vector.extract_strided_slice %26 {offsets = [0, 255], sizes = [1, 1], strides = [1, 1]} : vector<1x256xf32> to vector<1x1xf32>
      %c0_16 = arith.constant 0 : index
      %c0_17 = arith.constant 0 : index
      %44 = vector.load %arg6[%c0_16, %c0_17] : memref<1x1xf32, #tpu.memory_space<vmem>>, vector<1x1xf32>
      %c0_18 = arith.constant 0 : index
      %c0_19 = arith.constant 0 : index
      %45 = vector.load %arg7[%c0_18, %c0_19] : memref<1x1xf32, #tpu.memory_space<vmem>>, vector<1x1xf32>
      %46 = arith.addf %45, %43 : vector<1x1xf32>
      %cst_20 = arith.constant 5.000000e-01 : f32
      %47 = vector.broadcast %cst_20 : f32 to vector<1x1xf32>
      %48 = arith.mulf %47, %46 : vector<1x1xf32>
      %49 = arith.subf %44, %48 : vector<1x1xf32>
      %50 = tpu.reciprocal %49 : vector<1x1xf32> -> vector<1x1xf32>
      %c0_21 = arith.constant 0 : index
      %c0_22 = arith.constant 0 : index
      %51 = vector.load %arg8[%c0_21, %c0_22] : memref<1x1xf32, #tpu.memory_space<vmem>>, vector<1x1xf32>
      tpu.vector_store %arg8[%c0_21, %c0_22], %50 {strides = array<i32>} : memref<1x1xf32, #tpu.memory_space<vmem>>, vector<1x1xf32>,
      %cst_23 = arith.constant 0.000000e+00 : f32
      %52 = vector.broadcast %cst_23 : f32 to vector<1x1xf32>
      %c0_24 = arith.constant 0 : index
      %c0_25 = arith.constant 0 : index
      %53 = vector.load %arg6[%c0_24, %c0_25] : memref<1x1xf32, #tpu.memory_space<vmem>>, vector<1x1xf32>
      tpu.vector_store %arg6[%c0_24, %c0_25], %52 {strides = array<i32>} : memref<1x1xf32, #tpu.memory_space<vmem>>, vector<1x1xf32>,
    } else {
    }
    %37 = arith.extui %1 : i1 to i32
    %c0_i32_13 = arith.constant 0 : i32
    %38 = arith.cmpi ne, %37, %c0_i32_13 : i32
    scf.if %38 {
      %43 = tpu.iota {dimensions = array<i32: 0>} : vector<256x1xi32>
      %44 = tpu.iota {dimensions = array<i32: 1>} : vector<1x256xi32>
      %45 = vector.broadcast %43 : vector<256x1xi32> to vector<256x256xi32>
      %46 = vector.broadcast %44 : vector<1x256xi32> to vector<256x256xi32>
      %47 = arith.cmpi sle, %45, %46 : vector<256x256xi32>
      %48 = arith.extui %47 : vector<256x256xi1> to vector<256x256xi32>
      %49 = arith.sitofp %48 : vector<256x256xi32> to vector<256x256xf32>
      %cst_16 = arith.constant dense<0.000000e+00> : vector<1x256xf32>
      %50 = tpu.matmul %26, %49, %cst_16 {dimension_numbers = #tpu.dot_dimension_numbers<[1], [0], [0], [1], [0, 0, 1, 1], [], []>} : vector<1x256xf32>, vector<256x256xf32>, vector<1x256xf32> -> vector<1x256xf32>
      %51 = vector.extract_strided_slice %50 {offsets = [0, 255], sizes = [1, 1], strides = [1, 1]} : vector<1x256xf32> to vector<1x1xf32>
      %cst_17 = arith.constant 0.000000e+00 : f32
      %52 = vector.broadcast %cst_17 : f32 to vector<1x1xf32>
      %c0_18 = arith.constant 0 : index
      %c0_19 = arith.constant 0 : index
      %53 = vector.load %arg6[%c0_18, %c0_19] : memref<1x1xf32, #tpu.memory_space<vmem>>, vector<1x1xf32>
      %54 = vector.broadcast %52 : vector<1x1xf32> to vector<1x256xf32>
      %55 = arith.addf %50, %54 : vector<1x256xf32>
      %56 = vector.broadcast %53 : vector<1x1xf32> to vector<1x256xf32>
      %57 = arith.addf %55, %56 : vector<1x256xf32>
      %58 = arith.addf %53, %52 : vector<1x1xf32>
      %59 = arith.addf %58, %51 : vector<1x1xf32>
      %c0_20 = arith.constant 0 : index
      %c0_21 = arith.constant 0 : index
      %60 = vector.load %arg6[%c0_20, %c0_21] : memref<1x1xf32, #tpu.memory_space<vmem>>, vector<1x1xf32>
      tpu.vector_store %arg6[%c0_20, %c0_21], %59 {strides = array<i32>} : memref<1x1xf32, #tpu.memory_space<vmem>>, vector<1x1xf32>,
      %c0_22 = arith.constant 0 : index
      %c0_23 = arith.constant 0 : index
      %61 = vector.load %arg7[%c0_22, %c0_23] : memref<1x1xf32, #tpu.memory_space<vmem>>, vector<1x1xf32>
      %62 = vector.broadcast %61 : vector<1x1xf32> to vector<1x256xf32>
      %63 = arith.addf %26, %62 : vector<1x256xf32>
      %cst_24 = arith.constant 5.000000e-01 : f32
      %64 = vector.broadcast %cst_24 : f32 to vector<1x256xf32>
      %65 = arith.mulf %64, %63 : vector<1x256xf32>
      %66 = arith.subf %57, %65 : vector<1x256xf32>
      %c0_25 = arith.constant 0 : index
      %c0_26 = arith.constant 0 : index
      %67 = vector.load %arg8[%c0_25, %c0_26] : memref<1x1xf32, #tpu.memory_space<vmem>>, vector<1x1xf32>
      %68 = vector.broadcast %67 : vector<1x1xf32> to vector<1x256xf32>
      %69 = arith.mulf %66, %68 : vector<1x256xf32>
      %c0_27 = arith.constant 0 : index
      %c0_28 = arith.constant 0 : index
      %70 = vector.load %arg4[%c0_27, %c0_28] : memref<1x256xf32, #tpu.memory_space<vmem>>, vector<1x256xf32>
      %71 = arith.subf %70, %69 : vector<1x256xf32>
      %cst_29 = arith.constant 0.000000e+00 : f32
      %72 = vector.broadcast %cst_29 : f32 to vector<1x256xf32>
      %73 = arith.select %24, %71, %72 : vector<1x256xi1>, vector<1x256xf32>
      %c0_30 = arith.constant 0 : index
      %c0_31 = arith.constant 0 : index
      %74 = vector.load %arg9[%c0_30, %c0_31] : memref<1x1xf32, #tpu.memory_space<vmem>>, vector<1x1xf32>
      %75 = arith.mulf %73, %73 : vector<1x256xf32>
      %76 = vector.shape_cast %75 : vector<1x256xf32> to vector<1x1x256xf32>
      %cst_32 = arith.constant dense<0.000000e+00> : vector<1xf32>
      %77 = vector.multi_reduction <add>, %76, %cst_32 [1, 2] : vector<1x1x256xf32> to vector<1xf32>
      %78 = vector.shape_cast %77 : vector<1xf32> to vector<1x1x1xf32>
      %79 = vector.extract %78[0, 0, 0] : f32 from vector<1x1x1xf32>
      %80 = vector.broadcast %79 : f32 to vector<1x1xf32>
      %81 = arith.addf %74, %80 : vector<1x1xf32>
      %c0_33 = arith.constant 0 : index
      %c0_34 = arith.constant 0 : index
      %82 = vector.load %arg9[%c0_33, %c0_34] : memref<1x1xf32, #tpu.memory_space<vmem>>, vector<1x1xf32>
      tpu.vector_store %arg9[%c0_33, %c0_34], %81 {strides = array<i32>} : memref<1x1xf32, #tpu.memory_space<vmem>>, vector<1x1xf32>,
    } else {
    }
    %c0_i32_14 = arith.constant 0 : i32
    %39 = arith.cmpi eq, %arg1, %c0_i32_14 : i32
    %40 = arith.andi %1, %39 : i1
    %41 = arith.extui %40 : i1 to i32
    %c0_i32_15 = arith.constant 0 : i32
    %42 = arith.cmpi ne, %41, %c0_i32_15 : i32
    scf.if %42 {
      %c0_16 = arith.constant 0 : index
      %c0_17 = arith.constant 0 : index
      %43 = vector.load %arg9[%c0_16, %c0_17] : memref<1x1xf32, #tpu.memory_space<vmem>>, vector<1x1xf32>
      %cst_18 = arith.constant 0.00392156886 : f32
      %44 = vector.broadcast %cst_18 : f32 to vector<1x1xf32>
      %45 = arith.mulf %43, %44 : vector<1x1xf32>
      %c0_19 = arith.constant 0 : index
      %c0_20 = arith.constant 0 : index
      %46 = vector.load %arg5[%c0_19, %c0_20] : memref<1x1xf32, #tpu.memory_space<vmem>>, vector<1x1xf32>
      tpu.vector_store %arg5[%c0_19, %c0_20], %45 {strides = array<i32>} : memref<1x1xf32, #tpu.memory_space<vmem>>, vector<1x1xf32>,
    } else {
    }
    return
  }
  func.func @transform_0(%arg0: i32, %arg1: i32) -> (i32, i32) {
    %c0_i32 = arith.constant 0 : i32
    %c0_i32_0 = arith.constant 0 : i32
    return %arg1, %c0_i32 : i32, i32
  }
  func.func @transform_1(%arg0: i32, %arg1: i32) -> (i32, i32) {
    %c0_i32 = arith.constant 0 : i32
    %c0_i32_0 = arith.constant 0 : i32
    return %arg1, %c0_i32 : i32, i32
  }
  func.func @transform_2(%arg0: i32, %arg1: i32) -> (i32, i32) {
    %0 = arith.muli %arg1, %arg0 : i32
    %c0_i32 = arith.constant 0 : i32
    %c0_i32_0 = arith.constant 0 : i32
    return %0, %c0_i32 : i32, i32
  }
  func.func @transform_3(%arg0: i32, %arg1: i32) -> (i32, i32) {
    %c0_i32 = arith.constant 0 : i32
    %c0_i32_0 = arith.constant 0 : i32
    %c0_i32_1 = arith.constant 0 : i32
    return %c0_i32, %c0_i32_0 : i32, i32
  }
}

</mosaic_0001>

<llo_original>
// kernel: forward.1
$region0: #{forward.1}
  #allocation0 [shape = 'u32[]', space=smem, size = 0x4, offset = 0x4, fixed_abs, tag = 'smem constant byte address 0x4 - core index']
  #allocation1 [shape = 'u32[144,128]{1,0:T(1,128)}', space=vmem, size = 0x12000, scoped, tag = 'internal scratch']
  #allocation2 [shape = 'f32[1,1]{1,0:T(1,128)}', space=vmem, size = 0x200, scoped, tag = 'scratch operand']
  #allocation3 [shape = 'f32[1,1]{1,0:T(1,128)}', space=vmem, size = 0x200, scoped, tag = 'scratch operand']
  #allocation4 [shape = 'f32[1,1]{1,0:T(1,128)}', space=vmem, size = 0x200, scoped, tag = 'scratch operand']
  #allocation5 [shape = 'f32[1,1]{1,0:T(1,128)}', space=vmem, size = 0x200, scoped, tag = 'scratch operand']
  %s0 = inlined_call_operand.vmem [shape: f32[1,256], index: 0, kind: input, shape index: {}]
  %s1 = inlined_call_operand.vmem [shape: f32[1,256], index: 1, kind: input, shape index: {}]
  %s2 = inlined_call_operand.vmem [shape: f32[1,256], index: 2, kind: input, shape index: {}]
  %s3 = inlined_call_operand.hbm [shape: f32[1,1], index: 3, kind: output, shape index: {}]
  %s4 = sld [smem:[#allocation0]]
  $region65: #{forward.1} parent=0
    _
  %s6 = ssub.s32 1, %s4
  %s7 = scalar_select 0, %s6, %s4
  $region1: #{forward.1} parent=0
    #allocation6 [shape = 'u8[512]{0}', space=vmem, size = 0x400, scoped, tag = 'output window, operand 0, single buffered']
    #allocation7 [shape = 's32[2]{0}', space=sflag, size = 0x8, scoped, tag = 'scoped memory for forward.1']
    %8 = vsyncpa [#allocation7], 0
    loop: start=0, step=1, limit=4
    $region2: #{forward.1} parent=1 // loop_pre_header
      _
    $region3: #{forward.1} parent=1 // loop_header
      %s10 = sphi 0, %s14
      %p11 = scmp.ge.s32.totalorder %s10, 4
      %s17 = sphi 0, %s29
      %s18 = sphi 0, %s25
      %s19 = sphi 0, %s17
      %s20 = sphi 0, %s18
      %s21 = sphi 0, %s19
      %s22 = sphi 0, %s20
      %s32 = sphi 0, %s34
      %s35 = sphi 0, %s32
      %s36 = sphi 0, %s35
      %s52 = sphi 0, %s36
      %s58 = sphi 0, %s60
      %s61 = sphi 0, %s58
      %s62 = sphi 0, %s61
      %s78 = sphi 0, %s62
      %s86 = sphi 0, %s88
      %s89 = sphi 0, %s86
      %s90 = sphi 0, %s89
      %s106 = sphi 0, %s90
      %s110 = sphi 0, %s110
      %s112 = sphi 0, %s110
      %s113 = sphi 0, %s112
      %s127 = sphi 0, %s113
    $region4: #{forward.1} parent=1 // loop_header_branch
      %13 = sbr.rel (%p11) target = $region8
    $region5: #{forward.1} parent=1 // loop_body
      %s15 = ssub.s32 %s10, 1
      %s16 = ssub.s32 %s10, 2
      %s23 = sadd.s32 1, %s18
      %p24 = scmp.ge.s32.totalorder %s23, 1
      %s25 = scalar_select %p24, 0, %s23
      %s26 = sadd.s32 1, %s17
      %s27 = scalar_select %p24, %s26, %s17
      %p28 = scmp.ge.s32.totalorder %s27, 2
      %s29 = scalar_select %p28, 0, %s27
      %s30 = ssub.s32 %s18, %s25
      %p31 = scmp.eq.s32.totalorder %s30, 0
      %s33 = sadd.s32 %s32, 1
      %s34 = scalar_select %p31, %s32, %s33
      %p37 = pneg %p31
      %p38 = scmp.eq.s32.totalorder %s10, 1
      %p39 = por %p37, %p38
      %p40 = scmp.ne.s32.totalorder %s32, %s35
      %p41 = scmp.eq.s32.totalorder %s10, 0
      %p42 = por %p40, %p41
      %p43 = scmp.ne.s32.totalorder %s32, %s35
      %p44 = scmp.eq.s32.totalorder %s15, 1
      %p45 = por %p43, %p44
      %p46 = scmp.ne.s32.totalorder %s35, %s36
      %p47 = scmp.eq.s32.totalorder %s15, 0
      %p48 = por %p46, %p47
      %p49 = scmp.ne.s32.totalorder %s35, %s36
      %p50 = scmp.eq.s32.totalorder %s16, 1
      %p51 = por %p49, %p50
      %p53 = scmp.ne.s32.totalorder %s36, %s52
      %p54 = scmp.eq.s32.totalorder %s16, 0
      %p55 = por %p53, %p54
      %s56 = ssub.s32 %s18, %s25
      %p57 = scmp.eq.s32.totalorder %s56, 0
      %s59 = sadd.s32 %s58, 1
      %s60 = scalar_select %p57, %s58, %s59
      %p63 = pneg %p57
      %p64 = scmp.eq.s32.totalorder %s10, 1
      %p65 = por %p63, %p64
      %p66 = scmp.ne.s32.totalorder %s58, %s61
      %p67 = scmp.eq.s32.totalorder %s10, 0
      %p68 = por %p66, %p67
      %p69 = scmp.ne.s32.totalorder %s58, %s61
      %p70 = scmp.eq.s32.totalorder %s15, 1
      %p71 = por %p69, %p70
      %p72 = scmp.ne.s32.totalorder %s61, %s62
      %p73 = scmp.eq.s32.totalorder %s15, 0
      %p74 = por %p72, %p73
      %p75 = scmp.ne.s32.totalorder %s61, %s62
      %p76 = scmp.eq.s32.totalorder %s16, 1
      %p77 = por %p75, %p76
      %p79 = scmp.ne.s32.totalorder %s62, %s78
      %p80 = scmp.eq.s32.totalorder %s16, 0
      %p81 = por %p79, %p80
      %s82 = smul.u32 %s18, %s17
      %s83 = smul.u32 %s25, %s29
      %s84 = ssub.s32 %s82, %s83
      %p85 = scmp.eq.s32.totalorder %s84, 0
      %s87 = sadd.s32 %s86, 1
      %s88 = scalar_select %p85, %s86, %s87
      %p91 = pneg %p85
      %p92 = scmp.eq.s32.totalorder %s10, 1
      %p93 = por %p91, %p92
      %p94 = scmp.ne.s32.totalorder %s86, %s89
      %p95 = scmp.eq.s32.totalorder %s10, 0
      %p96 = por %p94, %p95
      %p97 = scmp.ne.s32.totalorder %s86, %s89
      %p98 = scmp.eq.s32.totalorder %s15, 1
      %p99 = por %p97, %p98
      %p100 = scmp.ne.s32.totalorder %s89, %s90
      %p101 = scmp.eq.s32.totalorder %s15, 0
      %p102 = por %p100, %p101
      %p103 = scmp.ne.s32.totalorder %s89, %s90
      %p104 = scmp.eq.s32.totalorder %s16, 1
      %p105 = por %p103, %p104
      %p107 = scmp.ne.s32.totalorder %s90, %s106
      %p108 = scmp.eq.s32.totalorder %s16, 0
      %p109 = por %p107, %p108
      %s111 = sadd.s32 %s110, 1
      %p114 = scmp.eq.s32.totalorder %s10, 1
      %p115 = scmp.ne.s32.totalorder %s110, %s112
      %p116 = scmp.eq.s32.totalorder %s10, 0
      %p117 = por %p115, %p116
      %p118 = scmp.ne.s32.totalorder %s110, %s112
      %p119 = scmp.eq.s32.totalorder %s15, 1
      %p120 = por %p118, %p119
      %p121 = scmp.ne.s32.totalorder %s112, %s113
      %p122 = scmp.eq.s32.totalorder %s15, 0
      %p123 = por %p121, %p122
      %p124 = scmp.ne.s32.totalorder %s112, %s113
      %p125 = scmp.eq.s32.totalorder %s16, 1
      %p126 = por %p124, %p125
      %p128 = scmp.ne.s32.totalorder %s113, %s127
      %p129 = scmp.eq.s32.totalorder %s16, 0
      %p130 = por %p128, %p129
      %p131 = scmp.le.s32.totalorder 1, %s10
      %p132 = scmp.lt.s32.totalorder %s10, 3
      %p133 = pnand %p131, %p132
      %p134 = pneg %p133
      // Predicated region
      $region9: #{forward.1} parent=5 // pred_check
        _
      $region10: #{forward.1} parent=5 // pred_check_branch
        %136 = sbr.rel (%p133) target = $region12
      $region11: #{forward.1} parent=5 // pred_region
        %s137 = ssub.s32 %s10, 1
        // Predicated region
        $region13: #{forward.1} parent=11 // pred_check
          %p138 = pneg %p48
        $region14: #{forward.1} parent=11 // pred_check_branch
          %140 = sbr.rel (%p138) target = $region16
        $region15: #{forward.1} parent=11 // pred_region
          %p141 = scmp.lt.s32.totalorder %s20, 0
          %s142 = scalar_select %p141, %s20, 0
          %s143 = smul.addr %s142, 2
          %s144 = scalar_lea.vmem %s0, %s143
        $region16: #{forward.1} parent=11 // pred_fallthru
          _
        // Predicated region
        $region17: #{forward.1} parent=11 // pred_check
          %p145 = pneg %p74
        $region18: #{forward.1} parent=11 // pred_check_branch
          %147 = sbr.rel (%p145) target = $region20
        $region19: #{forward.1} parent=11 // pred_region
          %p148 = scmp.lt.s32.totalorder %s20, 0
          %s149 = scalar_select %p148, %s20, 0
          %s150 = smul.addr %s149, 2
          %s151 = scalar_lea.vmem %s1, %s150
        $region20: #{forward.1} parent=11 // pred_fallthru
          _
      $region12: #{forward.1} parent=5 // pred_fallthru
        _
      %p152 = scmp.lt.s32.totalorder %s10, 2
      // Predicated region
      $region21: #{forward.1} parent=5 // pred_check
        %p153 = pneg %p152
      $region22: #{forward.1} parent=5 // pred_check_branch
        %155 = sbr.rel (%p153) target = $region24
      $region23: #{forward.1} parent=5 // pred_region
        // Predicated region
        $region25: #{forward.1} parent=23 // pred_check
          %p156 = pneg %p96
        $region26: #{forward.1} parent=23 // pred_check_branch
          %158 = sbr.rel (%p156) target = $region28
        $region27: #{forward.1} parent=23 // pred_region
          %s159 = smul.u32 %s18, %s17
          %p160 = scmp.lt.s32.totalorder %s159, 0
          %s161 = scalar_select %p160, %s159, 0
          %s162 = smul.addr %s161, 2
          %s163 = scalar_lea.vmem %s2, %s162
          %s164 = smul.u32 %s18, %s17
        $region28: #{forward.1} parent=23 // pred_fallthru
          _
      $region24: #{forward.1} parent=5 // pred_fallthru
        _
      %p165 = scmp.le.s32.totalorder 1, %s10
      %p166 = scmp.lt.s32.totalorder %s10, 3
      %p167 = pnand %p165, %p166
      %p168 = pneg %p167
      // Predicated region
      $region29: #{forward.1} parent=5 // pred_check
        _
      $region30: #{forward.1} parent=5 // pred_check_branch
        %170 = sbr.rel (%p167) target = $region32
      $region31: #{forward.1} parent=5 // pred_region
        %s171 = ssub.s32 %s10, 1
        %p172 = scmp.lt.s32.totalorder %s20, 0
        %s173 = scalar_select %p172, %s20, 0
        %s174 = smul.addr %s173, 2
        %s175 = scalar_lea.vmem %s0, %s174
        %p176 = pneg %p48
        %p177 = pneg %p45
        %p178 = scmp.lt.s32.totalorder %s20, 0
        %s179 = scalar_select %p178, %s20, 0
        %s180 = smul.addr %s179, 2
        %s181 = scalar_lea.vmem %s1, %s180
        %p182 = pneg %p74
        %p183 = pneg %p71
        %s184 = smul.u32 %s20, %s19
        %p185 = scmp.lt.s32.totalorder %s184, 0
        %s186 = scalar_select %p185, %s184, 0
        %s187 = smul.addr %s186, 2
        %s188 = scalar_lea.vmem %s2, %s187
        %p189 = pneg %p102
        %p190 = pneg %p99
        %p191 = pneg %p123
        %p192 = pneg %p120
        %p193 = scmp.lt.s32.totalorder %s20, 0
        %s194 = scalar_select %p193, %s20, 0
        %s195 = smul.addr %s194, 2
        %s196 = scalar_lea.vmem %s0, %s195
        %p197 = scmp.lt.s32.totalorder %s20, 0
        %s198 = scalar_select %p197, %s20, 0
        %s199 = smul.addr %s198, 2
        %s200 = scalar_lea.vmem %s1, %s199
        %s201 = smul.u32 %s20, %s19
        %p202 = scmp.lt.s32.totalorder %s201, 0
        %s203 = scalar_select %p202, %s201, 0
        %s204 = smul.addr %s203, 2
        %s205 = scalar_lea.vmem %s2, %s204
        %s206 = smul.u32 %s20, %s19
        %p207 = scmp.eq.s32.totalorder %s19, 0
        %p208 = scmp.eq.s32.totalorder %s19, 1
        %v209 = vld [vmem:[%s196] sm:$0x3]
        %v210 = vld [vmem:[%s200] sm:$0x3]
        %v211 = vmul.f32 %v209, %v210
        %v212 = vmax.f32 %v211, 0.0
        %v213 = vand.u32 2147483647, %v211
        %v214 = vsub.f32 0.0, %v213
        %v215 = vmul.f32 %v214, 1.442695
        %v216 = vpow.pop %v215
        %v217 = vadd.f32 %v216, 1.0
        %v218 = vlog2.pop %v217
        %v219 = vmul.f32 %v218, 0.6931472
        %v220 = vadd.f32 %v212, %v219
        %v221 = vlaneseq
        %v222 = vshrl.u32 %v221, 7
        %v223 = vlaneseq
        %v224 = vand.u32 %v223, 127
        %v225 = vadd.s32 %v224, 128
        %v226 = vmul.u32 %v222, 256
        %v227 = vadd.s32 %v226, %v224
        %v228 = vadd.s32 %v226, %v225
        %s229 = smul.u32 %s20, 256
        %s230 = ssub.s32 256, %s229
        %v231 = vstv %s230
        %vm232 = vcmp.lt.s32.totalorder %v227, %v231
        %vm233 = vcmp.lt.s32.totalorder %v228, %v231
        %v235 = vlaneseq
        %v236 = vshrl.u32 %v235, 7
        %v237 = vsub.s32 0, %v236
        %v238 = vrot.slane %v220, %v237
        %v239 = vlaneseq
        %v240 = vshrl.u32 %v239, 7
        %v241 = vsub.s32 1, %v240
        %v242 = vrot.slane %v220, %v241
        %v245 = vsel %vm232, %v238, 0.0
        %v246 = vsel %vm233, %v242, 0.0
        %p247 = scmp.eq.s32.totalorder %s20, 0
        %p248 = pnand %p207, %p247
        %p249 = pneg %p248
        // Predicated region
        $region33: #{forward.1} parent=31 // pred_check
          _
        $region34: #{forward.1} parent=31 // pred_check_branch
          %251 = sbr.rel (%p248) target = $region36
        $region35: #{forward.1} parent=31 // pred_region
          %vm252 = vcmask 0
          %253 = vst.msk [vmem:[#allocation2] sm:$0x1] %vm252, 0.0
          %254 = vst.msk [vmem:[#allocation5] sm:$0x1] %vm252, 0.0
          %255 = vst.msk [vmem:[#allocation3] sm:$0x1] %vm252, %v245
        $region36: #{forward.1} parent=31 // pred_fallthru
          _
        // Predicated region
        $region37: #{forward.1} parent=31 // pred_check
          %p256 = pneg %p207
        $region38: #{forward.1} parent=31 // pred_check_branch
          %258 = sbr.rel (%p256) target = $region40
        $region39: #{forward.1} parent=31 // pred_region
          %v259 = vld [vmem:[#allocation2] sm:$0x1]
          %vm260 = vcmask 1040384
          %v261 = vsel %vm260, %v245, 0.0
          %v262 = vsel %vm260, %v246, 0.0
          %v263 = vadd.f32 %v261, %v262
          %264 = vadd.xlane.f32.xlu0 %v263
          %v265 = vpop.xlane.xlu0 %264
          %v266 = vrot.slane %v265, 4
          %v267 = vadd.f32 %v265, %v266
          %v268 = vrot.slane %v267, 2
          %v269 = vadd.f32 %v267, %v268
          %v270 = vrot.slane %v269, 1
          %v271 = vadd.f32 %v269, %v270
          %s272 = vtos %v271
          %v273 = vstv %s272
          %v274 = vadd.f32 %v259, %v273
          %vm275 = vcmask 0
          %276 = vst.msk [vmem:[#allocation2] sm:$0x1] %vm275, %v274
        $region40: #{forward.1} parent=31 // pred_fallthru
          _
        // Predicated region
        $region41: #{forward.1} parent=31 // pred_check
          _
        $region42: #{forward.1} parent=31 // pred_check_branch
          %278 = sbr.rel (%p248) target = $region44
        $region43: #{forward.1} parent=31 // pred_region
          %v279 = vld [vmem:[#allocation2] sm:$0x1]
          %v280 = vld [vmem:[#allocation3] sm:$0x1]
          %v283 = vunpack.c.l.s4 1966171168
          %v284 = vunpack.c.0.s8 %v283
          %v285 = vlaneseq
          %v286 = vshrl.u32 %v285, 7
          %v287 = vsub.s32 %v284, %v286
          %v288 = vrot.slane %v246, %v287
          %v290 = vunpack.c.l.s4 1966171168
          %v291 = vunpack.c.0.s8 %v290
          %v292 = vlaneseq
          %v293 = vshrl.u32 %v292, 7
          %v294 = vsub.s32 %v291, %v293
          %v295 = vrot.slane %v288, %v294
          %296 = vrot.lane.b32.xlu0 %v295, 1
          %v297 = vpop.permute.xlu0 %296
          %v299 = vadd.f32 %v280, %v297
          %v300 = vmul.f32 %v299, 0.5
          %v301 = vsub.f32 %v279, %v300
          %v302 = vrcp.pop %v301
          %vm303 = vcmask 0
          %304 = vst.msk [vmem:[#allocation4] sm:$0x1] %vm303, %v302
          %305 = vst.msk [vmem:[#allocation2] sm:$0x1] %vm303, 0.0
        $region44: #{forward.1} parent=31 // pred_fallthru
          _
        // Predicated region
        $region45: #{forward.1} parent=31 // pred_check
          %p306 = pneg %p208
        $region46: #{forward.1} parent=31 // pred_check_branch
          %308 = sbr.rel (%p306) target = $region48
        $region47: #{forward.1} parent=31 // pred_region
          %v309 = vadd.s32 %v222, 8
          %v310 = vadd.s32 %v222, 16
          %v311 = vadd.s32 %v222, 24
          %v312 = vadd.s32 %v222, 32
          %v313 = vadd.s32 %v222, 40
          %v314 = vadd.s32 %v222, 48
          %v315 = vadd.s32 %v222, 56
          %v316 = vadd.s32 %v222, 64
          %v317 = vadd.s32 %v222, 72
          %v318 = vadd.s32 %v222, 80
          %v319 = vadd.s32 %v222, 88
          %v320 = vadd.s32 %v222, 96
          %v321 = vadd.s32 %v222, 104
          %v322 = vadd.s32 %v222, 112
          %v323 = vadd.s32 %v222, 120
          %v324 = vadd.s32 %v222, 128
          %v325 = vadd.s32 %v222, 136
          %v326 = vadd.s32 %v222, 144
          %v327 = vadd.s32 %v222, 152
          %v328 = vadd.s32 %v222, 160
          %v329 = vadd.s32 %v222, 168
          %v330 = vadd.s32 %v222, 176
          %v331 = vadd.s32 %v222, 184
          %v332 = vadd.s32 %v222, 192
          %v333 = vadd.s32 %v222, 200
          %v334 = vadd.s32 %v222, 208
          %v335 = vadd.s32 %v222, 216
          %v336 = vadd.s32 %v222, 224
          %v337 = vadd.s32 %v222, 232
          %v338 = vadd.s32 %v222, 240
          %v339 = vadd.s32 %v222, 248
          %vm340 = vcmp.le.s32.totalorder %v222, %v224
          %vm341 = vcmp.le.s32.totalorder %v222, %v225
          %vm342 = vcmp.le.s32.totalorder %v309, %v224
          %vm343 = vcmp.le.s32.totalorder %v309, %v225
          %vm344 = vcmp.le.s32.totalorder %v310, %v224
          %vm345 = vcmp.le.s32.totalorder %v310, %v225
          %vm346 = vcmp.le.s32.totalorder %v311, %v224
          %vm347 = vcmp.le.s32.totalorder %v311, %v225
          %vm348 = vcmp.le.s32.totalorder %v312, %v224
          %vm349 = vcmp.le.s32.totalorder %v312, %v225
          %vm350 = vcmp.le.s32.totalorder %v313, %v224
          %vm351 = vcmp.le.s32.totalorder %v313, %v225
          %vm352 = vcmp.le.s32.totalorder %v314, %v224
          %vm353 = vcmp.le.s32.totalorder %v314, %v225
          %vm354 = vcmp.le.s32.totalorder %v315, %v224
          %vm355 = vcmp.le.s32.totalorder %v315, %v225
          %vm356 = vcmp.le.s32.totalorder %v316, %v224
          %vm357 = vcmp.le.s32.totalorder %v316, %v225
          %vm358 = vcmp.le.s32.totalorder %v317, %v224
          %vm359 = vcmp.le.s32.totalorder %v317, %v225
          %vm360 = vcmp.le.s32.totalorder %v318, %v224
          %vm361 = vcmp.le.s32.totalorder %v318, %v225
          %vm362 = vcmp.le.s32.totalorder %v319, %v224
          %vm363 = vcmp.le.s32.totalorder %v319, %v225
          %vm364 = vcmp.le.s32.totalorder %v320, %v224
          %vm365 = vcmp.le.s32.totalorder %v320, %v225
          %vm366 = vcmp.le.s32.totalorder %v321, %v224
          %vm367 = vcmp.le.s32.totalorder %v321, %v225
          %vm368 = vcmp.le.s32.totalorder %v322, %v224
          %vm369 = vcmp.le.s32.totalorder %v322, %v225
          %vm370 = vcmp.le.s32.totalorder %v323, %v224
          %vm371 = vcmp.le.s32.totalorder %v323, %v225
          %vm372 = vcmp.le.s32.totalorder %v324, %v224
          %vm373 = vcmp.le.s32.totalorder %v324, %v225
          %vm374 = vcmp.le.s32.totalorder %v325, %v224
          %vm375 = vcmp.le.s32.totalorder %v325, %v225
          %vm376 = vcmp.le.s32.totalorder %v326, %v224
          %vm377 = vcmp.le.s32.totalorder %v326, %v225
          %vm378 = vcmp.le.s32.totalorder %v327, %v224
          %vm379 = vcmp.le.s32.totalorder %v327, %v225
          %vm380 = vcmp.le.s32.totalorder %v328, %v224
          %vm381 = vcmp.le.s32.totalorder %v328, %v225
          %vm382 = vcmp.le.s32.totalorder %v329, %v224
          %vm383 = vcmp.le.s32.totalorder %v329, %v225
          %vm384 = vcmp.le.s32.totalorder %v330, %v224
          %vm385 = vcmp.le.s32.totalorder %v330, %v225
          %vm386 = vcmp.le.s32.totalorder %v331, %v224
          %vm387 = vcmp.le.s32.totalorder %v331, %v225
          %vm388 = vcmp.le.s32.totalorder %v332, %v224
          %vm389 = vcmp.le.s32.totalorder %v332, %v225
          %vm390 = vcmp.le.s32.totalorder %v333, %v224
          %vm391 = vcmp.le.s32.totalorder %v333, %v225
          %vm392 = vcmp.le.s32.totalorder %v334, %v224
          %vm393 = vcmp.le.s32.totalorder %v334, %v225
          %vm394 = vcmp.le.s32.totalorder %v335, %v224
          %vm395 = vcmp.le.s32.totalorder %v335, %v225
          %vm396 = vcmp.le.s32.totalorder %v336, %v224
          %vm397 = vcmp.le.s32.totalorder %v336, %v225
          %vm398 = vcmp.le.s32.totalorder %v337, %v224
          %vm399 = vcmp.le.s32.totalorder %v337, %v225
          %vm400 = vcmp.le.s32.totalorder %v338, %v224
          %vm401 = vcmp.le.s32.totalorder %v338, %v225
          %vm402 = vcmp.le.s32.totalorder %v339, %v224
          %vm403 = vcmp.le.s32.totalorder %v339, %v225
          %v404 = vsel %vm340, 1, 0
          %v405 = vsel %vm341, 1, 0
          %v406 = vsel %vm342, 1, 0
          %v407 = vsel %vm343, 1, 0
          %v408 = vsel %vm344, 1, 0
          %v409 = vsel %vm345, 1, 0
          %v410 = vsel %vm346, 1, 0
          %v411 = vsel %vm347, 1, 0
          %v412 = vsel %vm348, 1, 0
          %v413 = vsel %vm349, 1, 0
          %v414 = vsel %vm350, 1, 0
          %v415 = vsel %vm351, 1, 0
          %v416 = vsel %vm352, 1, 0
          %v417 = vsel %vm353, 1, 0
          %v418 = vsel %vm354, 1, 0
          %v419 = vsel %vm355, 1, 0
          %v420 = vsel %vm356, 1, 0
          %v421 = vsel %vm357, 1, 0
          %v422 = vsel %vm358, 1, 0
          %v423 = vsel %vm359, 1, 0
          %v424 = vsel %vm360, 1, 0
          %v425 = vsel %vm361, 1, 0
          %v426 = vsel %vm362, 1, 0
          %v427 = vsel %vm363, 1, 0
          %v428 = vsel %vm364, 1, 0
          %v429 = vsel %vm365, 1, 0
          %v430 = vsel %vm366, 1, 0
          %v431 = vsel %vm367, 1, 0
          %v432 = vsel %vm368, 1, 0
          %v433 = vsel %vm369, 1, 0
          %v434 = vsel %vm370, 1, 0
          %v435 = vsel %vm371, 1, 0
          %v436 = vsel %vm372, 1, 0
          %v437 = vsel %vm373, 1, 0
          %v438 = vsel %vm374, 1, 0
          %v439 = vsel %vm375, 1, 0
          %v440 = vsel %vm376, 1, 0
          %v441 = vsel %vm377, 1, 0
          %v442 = vsel %vm378, 1, 0
          %v443 = vsel %vm379, 1, 0
          %v444 = vsel %vm380, 1, 0
          %v445 = vsel %vm381, 1, 0
          %v446 = vsel %vm382, 1, 0
          %v447 = vsel %vm383, 1, 0
          %v448 = vsel %vm384, 1, 0
          %v449 = vsel %vm385, 1, 0
          %v450 = vsel %vm386, 1, 0
          %v451 = vsel %vm387, 1, 0
          %v452 = vsel %vm388, 1, 0
          %v453 = vsel %vm389, 1, 0
          %v454 = vsel %vm390, 1, 0
          %v455 = vsel %vm391, 1, 0
          %v456 = vsel %vm392, 1, 0
          %v457 = vsel %vm393, 1, 0
          %v458 = vsel %vm394, 1, 0
          %v459 = vsel %vm395, 1, 0
          %v460 = vsel %vm396, 1, 0
          %v461 = vsel %vm397, 1, 0
          %v462 = vsel %vm398, 1, 0
          %v463 = vsel %vm399, 1, 0
          %v464 = vsel %vm400, 1, 0
          %v465 = vsel %vm401, 1, 0
          %v466 = vsel %vm402, 1, 0
          %v467 = vsel %vm403, 1, 0
          %v468 = vcvt.s32.f32 %v404
          %v469 = vcvt.s32.f32 %v405
          %v470 = vcvt.s32.f32 %v406
          %v471 = vcvt.s32.f32 %v407
          %v472 = vcvt.s32.f32 %v408
          %v473 = vcvt.s32.f32 %v409
          %v474 = vcvt.s32.f32 %v410
          %v475 = vcvt.s32.f32 %v411
          %v476 = vcvt.s32.f32 %v412
          %v477 = vcvt.s32.f32 %v413
          %v478 = vcvt.s32.f32 %v414
          %v479 = vcvt.s32.f32 %v415
          %v480 = vcvt.s32.f32 %v416
          %v481 = vcvt.s32.f32 %v417
          %v482 = vcvt.s32.f32 %v418
          %v483 = vcvt.s32.f32 %v419
          %v484 = vcvt.s32.f32 %v420
          %v485 = vcvt.s32.f32 %v421
          %v486 = vcvt.s32.f32 %v422
          %v487 = vcvt.s32.f32 %v423
          %v488 = vcvt.s32.f32 %v424
          %v489 = vcvt.s32.f32 %v425
          %v490 = vcvt.s32.f32 %v426
          %v491 = vcvt.s32.f32 %v427
          %v492 = vcvt.s32.f32 %v428
          %v493 = vcvt.s32.f32 %v429
          %v494 = vcvt.s32.f32 %v430
          %v495 = vcvt.s32.f32 %v431
          %v496 = vcvt.s32.f32 %v432
          %v497 = vcvt.s32.f32 %v433
          %v498 = vcvt.s32.f32 %v434
          %v499 = vcvt.s32.f32 %v435
          %v500 = vcvt.s32.f32 %v436
          %v501 = vcvt.s32.f32 %v437
          %v502 = vcvt.s32.f32 %v438
          %v503 = vcvt.s32.f32 %v439
          %v504 = vcvt.s32.f32 %v440
          %v505 = vcvt.s32.f32 %v441
          %v506 = vcvt.s32.f32 %v442
          %v507 = vcvt.s32.f32 %v443
          %v508 = vcvt.s32.f32 %v444
          %v509 = vcvt.s32.f32 %v445
          %v510 = vcvt.s32.f32 %v446
          %v511 = vcvt.s32.f32 %v447
          %v512 = vcvt.s32.f32 %v448
          %v513 = vcvt.s32.f32 %v449
          %v514 = vcvt.s32.f32 %v450
          %v515 = vcvt.s32.f32 %v451
          %v516 = vcvt.s32.f32 %v452
          %v517 = vcvt.s32.f32 %v453
          %v518 = vcvt.s32.f32 %v454
          %v519 = vcvt.s32.f32 %v455
          %v520 = vcvt.s32.f32 %v456
          %v521 = vcvt.s32.f32 %v457
          %v522 = vcvt.s32.f32 %v458
          %v523 = vcvt.s32.f32 %v459
          %v524 = vcvt.s32.f32 %v460
          %v525 = vcvt.s32.f32 %v461
          %v526 = vcvt.s32.f32 %v462
          %v527 = vcvt.s32.f32 %v463
          %v528 = vcvt.s32.f32 %v464
          %v529 = vcvt.s32.f32 %v465
          %v530 = vcvt.s32.f32 %v466
          %v531 = vcvt.s32.f32 %v467
          %532 = vmatprep.subr.mxu0 %v469
          %533 = vmatpush1.msra.mxu0 %v468
          %534 = vmatprep.subr.mxu0 %v471
          %535 = vmatpush1.msra.mxu0 %v470
          %536 = vmatprep.subr.mxu0 %v473
          %537 = vmatpush1.msra.mxu0 %v472
          %538 = vmatprep.subr.mxu0 %v475
          %539 = vmatpush1.msra.mxu0 %v474
          %540 = vmatprep.subr.mxu0 %v477
          %541 = vmatpush1.msra.mxu0 %v476
          %542 = vmatprep.subr.mxu0 %v479
          %543 = vmatpush1.msra.mxu0 %v478
          %544 = vmatprep.subr.mxu0 %v481
          %545 = vmatpush1.msra.mxu0 %v480
          %546 = vmatprep.subr.mxu0 %v483
          %547 = vmatpush1.msra.mxu0 %v482
          %548 = vmatprep.subr.mxu0 %v485
          %549 = vmatpush1.msra.mxu0 %v484
          %550 = vmatprep.subr.mxu0 %v487
          %551 = vmatpush1.msra.mxu0 %v486
          %552 = vmatprep.subr.mxu0 %v489
          %553 = vmatpush1.msra.mxu0 %v488
          %554 = vmatprep.subr.mxu0 %v491
          %555 = vmatpush1.msra.mxu0 %v490
          %556 = vmatprep.subr.mxu0 %v493
          %557 = vmatpush1.msra.mxu0 %v492
          %558 = vmatprep.subr.mxu0 %v495
          %559 = vmatpush1.msra.mxu0 %v494
          %560 = vmatprep.subr.mxu0 %v497
          %561 = vmatpush1.msra.mxu0 %v496
          %562 = vmatprep.subr.mxu0 %v499
          %563 = vmatpush1.msra.mxu0 %v498
          %564 = vmatprep.subr.mxu0 %v501
          %565 = vmatpush1.msra.mxu0 %v500
          %566 = vmatprep.subr.mxu0 %v503
          %567 = vmatpush1.msra.mxu0 %v502
          %568 = vmatprep.subr.mxu0 %v505
          %569 = vmatpush1.msra.mxu0 %v504
          %570 = vmatprep.subr.mxu0 %v507
          %571 = vmatpush1.msra.mxu0 %v506
          %572 = vmatprep.subr.mxu0 %v509
          %573 = vmatpush1.msra.mxu0 %v508
          %574 = vmatprep.subr.mxu0 %v511
          %575 = vmatpush1.msra.mxu0 %v510
          %576 = vmatprep.subr.mxu0 %v513
          %577 = vmatpush1.msra.mxu0 %v512
          %578 = vmatprep.subr.mxu0 %v515
          %579 = vmatpush1.msra.mxu0 %v514
          %580 = vmatprep.subr.mxu0 %v517
          %581 = vmatpush1.msra.mxu0 %v516
          %582 = vmatprep.subr.mxu0 %v519
          %583 = vmatpush1.msra.mxu0 %v518
          %584 = vmatprep.subr.mxu0 %v521
          %585 = vmatpush1.msra.mxu0 %v520
          %586 = vmatprep.subr.mxu0 %v523
          %587 = vmatpush1.msra.mxu0 %v522
          %588 = vmatprep.subr.mxu0 %v525
          %589 = vmatpush1.msra.mxu0 %v524
          %590 = vmatprep.subr.mxu0 %v527
          %591 = vmatpush1.msra.mxu0 %v526
          %592 = vmatprep.subr.mxu0 %v529
          %593 = vmatpush1.msra.mxu0 %v528
          %594 = vmatprep.subr.mxu0 %v531
          %595 = vmatpush1.msra.mxu0 %v530
          %596 = vmatprep.mubr.f32.mxu0 %v246
          %597 = vmatmul.mubr.f32.gmra.mrb[0].mxu0 %v245
          %v598 = vpop.f32.mrb[0].mxu0
          %v599 = vadd.f32 0.0, %v598
          %v600 = vpop.f32.mrb[0].mxu0
          %v601 = vadd.f32 0.0, %v600
          %602 = vdwg.mxu0
          %v603 = vld [vmem:[#allocation2] sm:$0x1]
          %v604 = vadd.f32 %v599, 0.0
          %v605 = vadd.f32 %v601, 0.0
          %607 = vset.pattern.permute.xlu0 0
          %608 = vperm.xlu0 %607, %v603
          %v609 = vpop.permute.xlu0 %608
          %v611 = vlaneseq
          %v612 = vshrl.u32 %v611, 7
          %v613 = vsub.s32 0, %v612
          %v614 = vrot.slane %v609, %v613
          %v615 = vadd.f32 %v604, %v614
          %v616 = vadd.f32 %v605, %v614
          %v617 = vadd.f32 %v603, 0.0
          %v620 = vunpack.c.l.s4 1966171168
          %v621 = vunpack.c.0.s8 %v620
          %v622 = vlaneseq
          %v623 = vshrl.u32 %v622, 7
          %v624 = vsub.s32 %v621, %v623
          %v625 = vrot.slane %v601, %v624
          %v627 = vunpack.c.l.s4 1966171168
          %v628 = vunpack.c.0.s8 %v627
          %v629 = vlaneseq
          %v630 = vshrl.u32 %v629, 7
          %v631 = vsub.s32 %v628, %v630
          %v632 = vrot.slane %v625, %v631
          %633 = vrot.lane.b32.xlu0 %v632, 1
          %v634 = vpop.permute.xlu0 %633
          %v636 = vadd.f32 %v617, %v634
          %vm637 = vcmask 0
          %638 = vst.msk [vmem:[#allocation2] sm:$0x1] %vm637, %v636
          %v639 = vld [vmem:[#allocation3] sm:$0x1]
          %641 = vset.pattern.permute.xlu0 0
          %642 = vperm.xlu0 %641, %v639
          %v643 = vpop.permute.xlu0 %642
          %v645 = vlaneseq
          %v646 = vshrl.u32 %v645, 7
          %v647 = vsub.s32 0, %v646
          %v648 = vrot.slane %v643, %v647
          %v649 = vadd.f32 %v245, %v648
          %v650 = vadd.f32 %v246, %v648
          %v651 = vmul.f32 %v649, 0.5
          %v652 = vmul.f32 %v650, 0.5
          %v653 = vsub.f32 %v615, %v651
          %v654 = vsub.f32 %v616, %v652
          %v655 = vld [vmem:[#allocation4] sm:$0x1]
          %657 = vset.pattern.permute.xlu0 0
          %658 = vperm.xlu0 %657, %v655
          %v659 = vpop.permute.xlu0 %658
          %v661 = vlaneseq
          %v662 = vshrl.u32 %v661, 7
          %v663 = vsub.s32 0, %v662
          %v664 = vrot.slane %v659, %v663
          %v665 = vmul.f32 %v653, %v664
          %v666 = vmul.f32 %v654, %v664
          %v667 = vld [vmem:[%s205] sm:$0x3]
          %v670 = vcombine.low %v665, %v666
          %v672 = vunpack.c.l.s4 1966171168
          %v673 = vunpack.c.0.s8 %v672
          %v674 = vlaneseq
          %v675 = vshrl.u32 %v674, 7
          %v676 = vsub.s32 %v673, %v675
          %v677 = vrot.slane %v670, %v676
          %v679 = vunpack.c.l.s4 1966171168
          %v680 = vunpack.c.0.s8 %v679
          %v681 = vlaneseq
          %v682 = vshrl.u32 %v681, 7
          %v683 = vsub.s32 %v680, %v682
          %v684 = vrot.slane %v677, %v683
          %v686 = vsub.f32 %v667, %v684
          %v688 = vlaneseq
          %v689 = vshrl.u32 %v688, 7
          %v690 = vsub.s32 0, %v689
          %v691 = vrot.slane %v686, %v690
          %v692 = vlaneseq
          %v693 = vshrl.u32 %v692, 7
          %v694 = vsub.s32 1, %v693
          %v695 = vrot.slane %v686, %v694
          %v698 = vsel %vm232, %v691, 0.0
          %v699 = vsel %vm233, %v695, 0.0
          %v700 = vld [vmem:[#allocation5] sm:$0x1]
          %v701 = vmul.f32 %v698, %v698
          %v702 = vmul.f32 %v699, %v699
          %vm703 = vcmask 1040384
          %v704 = vsel %vm703, %v701, 0.0
          %v705 = vsel %vm703, %v702, 0.0
          %v706 = vadd.f32 %v704, %v705
          %707 = vadd.xlane.f32.xlu0 %v706
          %v708 = vpop.xlane.xlu0 %707
          %v709 = vrot.slane %v708, 4
          %v710 = vadd.f32 %v708, %v709
          %v711 = vrot.slane %v710, 2
          %v712 = vadd.f32 %v710, %v711
          %v713 = vrot.slane %v712, 1
          %v714 = vadd.f32 %v712, %v713
          %s715 = vtos %v714
          %v716 = vstv %s715
          %v717 = vadd.f32 %v700, %v716
          %718 = vst.msk [vmem:[#allocation5] sm:$0x1] %vm637, %v717
        $region48: #{forward.1} parent=31 // pred_fallthru
          _
        %p719 = pnand %p208, %p247
        %p720 = pneg %p719
        // Predicated region
        $region49: #{forward.1} parent=31 // pred_check
          _
        $region50: #{forward.1} parent=31 // pred_check_branch
          %722 = sbr.rel (%p719) target = $region52
        $region51: #{forward.1} parent=31 // pred_region
          %v723 = vld [vmem:[#allocation5] sm:$0x1]
          %v724 = vmul.f32 %v723, 0.003921569
          %vm725 = vcmask 0
          %726 = vst.msk [vmem:[#allocation6] sm:$0x1] %vm725, %v724
        $region52: #{forward.1} parent=31 // pred_fallthru
          _
        // Predicated region
        $region53: #{forward.1} parent=31 // pred_check
          %p727 = pneg %p120
        $region54: #{forward.1} parent=31 // pred_check_branch
          %729 = sbr.rel (%p727) target = $region56
        $region55: #{forward.1} parent=31 // pred_region
          %s731 = ssub.s32 16, 16
          %732 = vsyncadd [#allocation7], %s731
          %s734 = sshll.u32 [#allocation6], 4
          %s735 = int_to_ptr.vmem [resolvable:$true] %s734
          %737 = dma.vmem_to_hbm [thread:$0]  %s735, 16, %s3, [#allocation7]
        $region56: #{forward.1} parent=31 // pred_fallthru
          _
        // Predicated region
        $region57: #{forward.1} parent=31 // pred_check
          %p738 = pneg %p120
        $region58: #{forward.1} parent=31 // pred_check_branch
          %740 = sbr.rel (%p738) target = $region60
        $region59: #{forward.1} parent=31 // pred_region
          %741 = dma.done [#allocation7], 16
        $region60: #{forward.1} parent=31 // pred_fallthru
          _
      $region32: #{forward.1} parent=5 // pred_fallthru
        _
      %p742 = scmp.le.s32.totalorder 2, %s10
      // Predicated region
      $region61: #{forward.1} parent=5 // pred_check
        %p743 = pneg %p742
      $region62: #{forward.1} parent=5 // pred_check_branch
        %745 = sbr.rel (%p743) target = $region64
      $region63: #{forward.1} parent=5 // pred_region
        %s746 = ssub.s32 %s10, 2
      $region64: #{forward.1} parent=5 // pred_fallthru
        _
    $region6: #{forward.1} parent=1 // loop_footer
      %s14 = sadd.s32 1, %s10
    $region7: #{forward.1} parent=1 // loop_footer_branch
      %9 = sbr.rel target = $region3
    $region8: #{forward.1} parent=1 // loop_exit
      _
    %747 = vsyncpa [#allocation7], 1
    %s748 = scalar_lea.sflag [#allocation7], 1
    %749 = vsyncpa %s748, 1

</llo_original>
